<compile_context>
chip_gen: v7x
topology: tpu7x:2x2x1
jax: 0.10.0
libtpu: 0.0.40
codegen_flags: <defaults>
</compile_context>

<pallas_src>
import functools

import jax
import jax.numpy as jnp
from jax.experimental import pallas as pl
from jax.experimental.pallas import tpu as pltpu


NUM_LANE_OUT = 6     # synthetic "lane channels" produced by the shared head
_MAX_TM = 512        # cap M tile (VMEM headroom on v7x's 64 MiB, enables M grid)
_MAX_TK = 1024       # single-shot K up to this; beyond -> K-tiled accumulator


def _round_up(x, m):
    return ((x + m - 1) // m) * m


# ----------------------------------------------------------------------------
# Pallas kernels: GEMM + fused bias + activation epilogue
# ----------------------------------------------------------------------------
def _apply_act(r, activation, act_row_start):
    if activation == "relu":
        return jnp.maximum(r, 0.0)
    if activation == "sigmoid":
        s = jax.nn.sigmoid(r)
        if act_row_start is None or act_row_start <= 0:
            return s
        # Sigmoid only for rows >= act_row_start (out[-1]'s rows); other rows
        # keep raw logits. Row index is global across the M grid axis.
        tm = r.shape[0]
        row = jax.lax.broadcasted_iota(jnp.int32, r.shape, 0) + pl.program_id(0) * tm
        return jnp.where(row >= act_row_start, s, r)
    return r


def _gemm_kernel(a_ref, b_ref, bias_ref, o_ref, *, activation, act_row_start):
    # Single K block: no accumulator scratch, no pl.when branches.
    r = jnp.dot(a_ref[...], b_ref[...], preferred_element_type=jnp.float32)
    r = r + bias_ref[...]
    r = _apply_act(r, activation, act_row_start)
    o_ref[...] = r.astype(o_ref.dtype)


def _gemm_acc_kernel(a_ref, b_ref, bias_ref, o_ref, acc_ref, *,
                     activation, act_row_start):
    # Fallback for large K (never hit at the toy sizes in this script).
    k = pl.program_id(2)

    @pl.when(k == 0)
    def _():
        acc_ref[...] = jnp.zeros_like(acc_ref)

    acc_ref[...] += jnp.dot(a_ref[...], b_ref[...],
                            preferred_element_type=jnp.float32)

    @pl.when(k == pl.num_programs(2) - 1)
    def _():
        r = acc_ref[...] + bias_ref[...]
        r = _apply_act(r, activation, act_row_start)
        o_ref[...] = r.astype(o_ref.dtype)


def gemm_bias_act(a, wmat_p, bias_p, n_out, activation="none", act_row_start=None):
    """act(a @ W + b); W / b are pre-padded & pre-cast at init time.

    a       : (M, K) float array
    wmat_p  : (Kp, Np) bfloat16, zero-padded (Kp, Np multiples of 128)
    bias_p  : (1, Np) float32, zero-padded
    returns : (M, n_out) float32
    """
    M, K = a.shape
    Kp, Np = wmat_p.shape
    assert K <= Kp and n_out <= Np

    # M tiling: pick tm first so Mp divides exactly.
    tm = min(_round_up(max(M, 1), 8), _MAX_TM)
    Mp = _round_up(M, tm)
    # Wider N tile feeds the full 256-wide MXU on v6e/v7x once N is packed.
    tn = 256 if (Np % 256 == 0) else 128

    a_p = jnp.zeros((Mp, Kp), jnp.bfloat16).at[:M, :K].set(a.astype(jnp.bfloat16))

    cost = pl.CostEstimate(
        flops=2 * Mp * Np * Kp,
        transcendentals=Mp * Np if activation == "sigmoid" else 0,
        bytes_accessed=Mp * Kp * 2 + Kp * Np * 2 + Mp * Np * 4 + Np * 4,
    )

    if Kp <= _MAX_TK:
        out = pl.pallas_call(
            functools.partial(_gemm_kernel, activation=activation,
                              act_row_start=act_row_start),
            out_shape=jax.ShapeDtypeStruct((Mp, Np), jnp.float32),
            grid_spec=pltpu.PrefetchScalarGridSpec(
                num_scalar_prefetch=0,
                grid=(Mp // tm, Np // tn),
                in_specs=[
                    pl.BlockSpec((tm, Kp), lambda i, j: (i, 0)),
                    pl.BlockSpec((Kp, tn), lambda i, j: (0, j)),
                    pl.BlockSpec((1, tn), lambda i, j: (0, j)),
                ],
                out_specs=pl.BlockSpec((tm, tn), lambda i, j: (i, j)),
            ),
            compiler_params=pltpu.CompilerParams(
                dimension_semantics=("parallel", "parallel")),
            cost_estimate=cost,
        )(a_p, wmat_p, bias_p)
    else:
        # K-tiled fallback (bias is re-streamed per k step here; acceptable
        # since this path is only for very large K).
        tk = _MAX_TK
        while Kp % tk:
            tk -= 128
        out = pl.pallas_call(
            functools.partial(_gemm_acc_kernel, activation=activation,
                              act_row_start=act_row_start),
            out_shape=jax.ShapeDtypeStruct((Mp, Np), jnp.float32),
            grid_spec=pltpu.PrefetchScalarGridSpec(
                num_scalar_prefetch=0,
                grid=(Mp // tm, Np // tn, Kp // tk),
                in_specs=[
                    pl.BlockSpec((tm, tk), lambda i, j, k: (i, k)),
                    pl.BlockSpec((tk, tn), lambda i, j, k: (k, j)),
                    pl.BlockSpec((1, tn), lambda i, j, k: (0, j)),
                ],
                out_specs=pl.BlockSpec((tm, tn), lambda i, j, k: (i, j)),
                scratch_shapes=[pltpu.VMEM((tm, tn), jnp.float32)],
            ),
            compiler_params=pltpu.CompilerParams(
                dimension_semantics=("parallel", "parallel", "arbitrary")),
            cost_estimate=cost,
        )(a_p, wmat_p, bias_p)

    return out[:M, :n_out]


# ----------------------------------------------------------------------------
# Conv2d = im2col (XLA glue, fused under jit) + Pallas GEMM (hot path)
# ----------------------------------------------------------------------------
def conv2d(x_nhwc, wmat_p, bias_p, cout, kh, kw, stride=1, padding=0,
           activation="none"):
    N, H, W, C = x_nhwc.shape
    Ho = (H + 2 * padding - kh) // stride + 1
    Wo = (W + 2 * padding - kw) // stride + 1
    xp = jnp.pad(x_nhwc, ((0, 0), (padding, padding), (padding, padding), (0, 0)))

    # TODO(synk): for larger resolutions, move this im2col gather into the Pallas
    # kernel (9 shifted strided reads of the resident VMEM tile) to avoid the
    # HBM-resident patches tensor; at toy sizes it is fused glue under jit.
    patches = []
    for i in range(kh):
        for j in range(kw):
            patches.append(xp[:, i:i + stride * Ho:stride,
                               j:j + stride * Wo:stride, :])
    patches = jnp.concatenate(patches, axis=-1)            # (N, Ho, Wo, kh*kw*C)
    a = patches.reshape(N * Ho * Wo, kh * kw * C)

    y = gemm_bias_act(a, wmat_p, bias_p, cout, activation=activation)
    return y.reshape(N, Ho, Wo, cout)


# ----------------------------------------------------------------------------
# Parameters: raw init + one-time preparation (transpose/pad/bf16/composition)
# ----------------------------------------------------------------------------
def init_params(key):
    keys = jax.random.split(key, 8)

    def w(k, shape, fan_in):
        return jax.random.normal(k, shape, jnp.float32) / jnp.sqrt(fan_in)

    raw = {}
    # backbone: 3 -> 8 -> 16 -> 32, 3x3 stride 2
    raw["bb1_w"] = w(keys[0], (8, 3, 3, 3), 3 * 9);    raw["bb1_b"] = jnp.zeros((8,), jnp.float32)
    raw["bb2_w"] = w(keys[1], (16, 8, 3, 3), 8 * 9);   raw["bb2_b"] = jnp.zeros((16,), jnp.float32)
    raw["bb3_w"] = w(keys[2], (32, 16, 3, 3), 16 * 9); raw["bb3_b"] = jnp.zeros((32,), jnp.float32)
    # neck: 1x1 laterals on fea[1:] -> 16 channels
    raw["neck2_w"] = w(keys[3], (16, 16, 1, 1), 16);   raw["neck2_b"] = jnp.zeros((16,), jnp.float32)
    raw["neck3_w"] = w(keys[4], (16, 32, 1, 1), 32);   raw["neck3_b"] = jnp.zeros((16,), jnp.float32)
    # heads: shared 1x1 conv, 16 -> NUM_LANE_OUT lane channels
    raw["head_w"] = w(keys[5], (NUM_LANE_OUT, 16, 1, 1), 16)
    raw["head_b"] = jnp.zeros((NUM_LANE_OUT,), jnp.float32)
    return raw


def _pad_weight(wmat, bias):
    K, N = wmat.shape
    Kp = max(_round_up(K, 128), 128)
    Np = max(_round_up(N, 128), 128)
    w_p = jnp.zeros((Kp, Np), jnp.bfloat16).at[:K, :N].set(wmat.astype(jnp.bfloat16))
    b_p = jnp.zeros((1, Np), jnp.float32).at[0, :N].set(bias.astype(jnp.float32))
    return w_p, b_p


def prepare_params(raw):
    """Hoist weight transpose / padding / bf16 cast / linear composition out of
    the forward path (done once at init)."""
    def conv_mat(w_oihw):
        cout, cin, kh, kw = w_oihw.shape
        # PyTorch (Cout,Cin,KH,KW) -> (KH,KW,Cin,Cout) -> (K, Cout); matches im2col.
        return jnp.transpose(w_oihw, (2, 3, 1, 0)).reshape(kh * kw * cin, cout)

    p = {}
    for name in ("bb1", "bb2", "bb3"):
        p[name + "_w"], p[name + "_b"] = _pad_weight(conv_mat(raw[name + "_w"]),
                                                     raw[name + "_b"])

    # Fused neck+head: both are 1x1 convs with no nonlinearity in between, so
    # compose per level (W_neck @ W_head, b_neck @ W_head + b_head) and lay the
    # two levels out block-diagonally (K = 32+16, N = 6+6) so the whole
    # neck->head path is ONE GEMM over the concatenated token matrix.
    n2 = conv_mat(raw["neck2_w"])            # (16, 16)
    n3 = conv_mat(raw["neck3_w"])            # (32, 16)
    hw = conv_mat(raw["head_w"])             # (16, NUM_LANE_OUT)
    hb = raw["head_b"]
    wc3 = n3 @ hw                            # (32, 6)   level-3 composed
    bc3 = raw["neck3_b"] @ hw + hb
    wc2 = n2 @ hw                            # (16, 6)   level-2 composed
    bc2 = raw["neck2_b"] @ hw + hb

    nh_w = jnp.zeros((32 + 16, 2 * NUM_LANE_OUT), jnp.float32)
    nh_w = nh_w.at[:32, :NUM_LANE_OUT].set(wc3).at[32:, NUM_LANE_OUT:].set(wc2)
    nh_b = jnp.concatenate([bc3, bc2])
    p["neckhead_w"], p["neckhead_b"] = _pad_weight(nh_w, nh_b)
    return p


# ----------------------------------------------------------------------------
# Detector.forward (eval branch)
# ----------------------------------------------------------------------------
@jax.jit
def detector_forward(params, img_nchw):
    # batch['img'].to(float32); NCHW -> NHWC
    x = jnp.transpose(img_nchw.astype(jnp.float32), (0, 2, 3, 1))
    Nb = x.shape[0]

    # backbone
    f1 = conv2d(x,  params["bb1_w"], params["bb1_b"], 8,  3, 3,
                stride=2, padding=1, activation="relu")
    f2 = conv2d(f1, params["bb2_w"], params["bb2_b"], 16, 3, 3,
                stride=2, padding=1, activation="relu")
    f3 = conv2d(f2, params["bb3_w"], params["bb3_b"], 32, 3, 3,
                stride=2, padding=1, activation="relu")
    fea = [f1, f2, f3]

    # neck(fea[1:]) ; fea.reverse() ; out = heads(fea)
    # Both neck 1x1 laterals and the shared head 1x1 conv are pre-composed into
    # one block-diagonal GEMM (see prepare_params).  Row layout follows the
    # reversed level order [level-3, level-2] so out[-1] == level-2; the sigmoid
    # of get_lanes is applied in-kernel only to those rows (act_row_start=M3).
    _, H2, W2, C2 = fea[1].shape
    _, H3, W3, C3 = fea[2].shape
    M2 = Nb * H2 * W2
    M3 = Nb * H3 * W3
    t2 = fea[1].reshape(M2, C2)                            # K slots [32:48)
    t3 = fea[2].reshape(M3, C3)                            # K slots [0:32)
    a_nh = jnp.concatenate(
        [jnp.pad(t3, ((0, 0), (0, C2))),
         jnp.pad(t2, ((0, 0), (C3, 0)))], axis=0)          # (M3+M2, 48)
    nh = gemm_bias_act(a_nh, params["neckhead_w"], params["neckhead_b"],
                       2 * NUM_LANE_OUT, activation="sigmoid", act_row_start=M3)
    out = [nh[:M3, :NUM_LANE_OUT].reshape(Nb, H3, W3, NUM_LANE_OUT),   # logits (unused downstream)
           nh[M3:, NUM_LANE_OUT:].reshape(Nb, H2, W2, NUM_LANE_OUT)]   # sigmoid(head(n2))

    # heads.get_lanes(out[-1])
    # TODO(synk): real LaneDet lane decoding (anchor decode / NMS) is
    # config-specific; synthetic stand-in returns per-image lane confidences.
    scores = out[-1].mean(axis=(1, 2))                     # (Nb, NUM_LANE_OUT)
    return scores


if __name__ == "__main__":
    key = jax.random.PRNGKey(0)
    pkey, ikey = jax.random.split(key)

    raw = init_params(pkey)
    params = prepare_params(raw)   # transpose/pad/bf16/composition done once

    # batch['img']: NCHW, small shape
    img = jax.random.normal(ikey, (2, 3, 16, 16), jnp.float32)

    scores = detector_forward(params, img)
    jax.block_until_ready(scores)

    assert scores.shape == (2, NUM_LANE_OUT)
    assert bool(jnp.all(jnp.isfinite(scores)))
    print("KERNEL_OK")
</pallas_src>

<mosaic_0001>
module attributes {stable_mosaic.version = 11 : i64} {
  func.func @_gemm_kernel(%arg0: i32, %arg1: i32, %arg2: memref<128x128xbf16, #tpu.memory_space<vmem>>, %arg3: memref<128x128xbf16, #tpu.memory_space<vmem>>, %arg4: memref<1x128xf32, #tpu.memory_space<vmem>>, %arg5: memref<128x128xf32, #tpu.memory_space<vmem>>) attributes {dimension_semantics = [#tpu.dimension_semantics<parallel>, #tpu.dimension_semantics<parallel>], iteration_bounds = array<i64: 1, 1>, scalar_prefetch = 0 : i64, scratch_operands = 0 : i64, tpu.core_type = #tpu.core_type<tc>, window_params = [{transform_indices = @transform_0, window_bounds = array<i64: 128, 128>}, {transform_indices = @transform_1, window_bounds = array<i64: 128, 128>}, {transform_indices = @transform_2, window_bounds = array<i64: 1, 128>}, {transform_indices = @transform_3, window_bounds = array<i64: 128, 128>}]} {
    %c0 = arith.constant 0 : index
    %c0_0 = arith.constant 0 : index
    %0 = vector.load %arg2[%c0, %c0_0] : memref<128x128xbf16, #tpu.memory_space<vmem>>, vector<128x128xbf16>
    %c0_1 = arith.constant 0 : index
    %c0_2 = arith.constant 0 : index
    %1 = vector.load %arg3[%c0_1, %c0_2] : memref<128x128xbf16, #tpu.memory_space<vmem>>, vector<128x128xbf16>
    %cst = arith.constant dense<0.000000e+00> : vector<128x128xf32>
    %2 = tpu.matmul %0, %1, %cst {dimension_numbers = #tpu.dot_dimension_numbers<[1], [0], [0], [1], [0, 0, 1, 1], [], []>} : vector<128x128xbf16>, vector<128x128xbf16>, vector<128x128xf32> -> vector<128x128xf32>
    %c0_3 = arith.constant 0 : index
    %c0_4 = arith.constant 0 : index
    %3 = vector.load %arg4[%c0_3, %c0_4] : memref<1x128xf32, #tpu.memory_space<vmem>>, vector<1x128xf32>
    %4 = vector.broadcast %3 : vector<1x128xf32> to vector<128x128xf32>
    %5 = arith.addf %2, %4 : vector<128x128xf32>
    %cst_5 = arith.constant 0.000000e+00 : f32
    %6 = vector.broadcast %cst_5 : f32 to vector<128x128xf32>
    %7 = arith.maximumf %5, %6 : vector<128x128xf32>
    %c0_6 = arith.constant 0 : index
    %c0_7 = arith.constant 0 : index
    %8 = vector.load %arg5[%c0_6, %c0_7] : memref<128x128xf32, #tpu.memory_space<vmem>>, vector<128x128xf32>
    tpu.vector_store %arg5[%c0_6, %c0_7], %7 {strides = array<i32>} : memref<128x128xf32, #tpu.memory_space<vmem>>, vector<128x128xf32>,
    return
  }
  func.func @transform_0(%arg0: i32, %arg1: i32) -> (i32, i32) {
    %c0_i32 = arith.constant 0 : i32
    %c0_i32_0 = arith.constant 0 : i32
    return %arg0, %c0_i32 : i32, i32
  }
  func.func @transform_1(%arg0: i32, %arg1: i32) -> (i32, i32) {
    %c0_i32 = arith.constant 0 : i32
    %c0_i32_0 = arith.constant 0 : i32
    return %c0_i32, %arg1 : i32, i32
  }
  func.func @transform_2(%arg0: i32, %arg1: i32) -> (i32, i32) {
    %c0_i32 = arith.constant 0 : i32
    %c0_i32_0 = arith.constant 0 : i32
    return %c0_i32, %arg1 : i32, i32
  }
  func.func @transform_3(%arg0: i32, %arg1: i32) -> (i32, i32) {
    %c0_i32 = arith.constant 0 : i32
    return %arg0, %arg1 : i32, i32
  }
}

module attributes {stable_mosaic.version = 11 : i64} {
  func.func @_gemm_kernel(%arg0: i32, %arg1: i32, %arg2: memref<32x128xbf16, #tpu.memory_space<vmem>>, %arg3: memref<128x128xbf16, #tpu.memory_space<vmem>>, %arg4: memref<1x128xf32, #tpu.memory_space<vmem>>, %arg5: memref<32x128xf32, #tpu.memory_space<vmem>>) attributes {dimension_semantics = [#tpu.dimension_semantics<parallel>, #tpu.dimension_semantics<parallel>], iteration_bounds = array<i64: 1, 1>, scalar_prefetch = 0 : i64, scratch_operands = 0 : i64, tpu.core_type = #tpu.core_type<tc>, window_params = [{transform_indices = @transform_0, window_bounds = array<i64: 32, 128>}, {transform_indices = @transform_1, window_bounds = array<i64: 128, 128>}, {transform_indices = @transform_2, window_bounds = array<i64: 1, 128>}, {transform_indices = @transform_3, window_bounds = array<i64: 32, 128>}]} {
    %c0 = arith.constant 0 : index
    %c0_0 = arith.constant 0 : index
    %0 = vector.load %arg2[%c0, %c0_0] : memref<32x128xbf16, #tpu.memory_space<vmem>>, vector<32x128xbf16>
    %c0_1 = arith.constant 0 : index
    %c0_2 = arith.constant 0 : index
    %1 = vector.load %arg3[%c0_1, %c0_2] : memref<128x128xbf16, #tpu.memory_space<vmem>>, vector<128x128xbf16>
    %cst = arith.constant dense<0.000000e+00> : vector<32x128xf32>
    %2 = tpu.matmul %0, %1, %cst {dimension_numbers = #tpu.dot_dimension_numbers<[1], [0], [0], [1], [0, 0, 1, 1], [], []>} : vector<32x128xbf16>, vector<128x128xbf16>, vector<32x128xf32> -> vector<32x128xf32>
    %c0_3 = arith.constant 0 : index
    %c0_4 = arith.constant 0 : index
    %3 = vector.load %arg4[%c0_3, %c0_4] : memref<1x128xf32, #tpu.memory_space<vmem>>, vector<1x128xf32>
    %4 = vector.broadcast %3 : vector<1x128xf32> to vector<32x128xf32>
    %5 = arith.addf %2, %4 : vector<32x128xf32>
    %cst_5 = arith.constant 0.000000e+00 : f32
    %6 = vector.broadcast %cst_5 : f32 to vector<32x128xf32>
    %7 = arith.maximumf %5, %6 : vector<32x128xf32>
    %c0_6 = arith.constant 0 : index
    %c0_7 = arith.constant 0 : index
    %8 = vector.load %arg5[%c0_6, %c0_7] : memref<32x128xf32, #tpu.memory_space<vmem>>, vector<32x128xf32>
    tpu.vector_store %arg5[%c0_6, %c0_7], %7 {strides = array<i32>} : memref<32x128xf32, #tpu.memory_space<vmem>>, vector<32x128xf32>,
    return
  }
  func.func @transform_0(%arg0: i32, %arg1: i32) -> (i32, i32) {
    %c0_i32 = arith.constant 0 : i32
    %c0_i32_0 = arith.constant 0 : i32
    return %arg0, %c0_i32 : i32, i32
  }
  func.func @transform_1(%arg0: i32, %arg1: i32) -> (i32, i32) {
    %c0_i32 = arith.constant 0 : i32
    %c0_i32_0 = arith.constant 0 : i32
    return %c0_i32, %arg1 : i32, i32
  }
  func.func @transform_2(%arg0: i32, %arg1: i32) -> (i32, i32) {
    %c0_i32 = arith.constant 0 : i32
    %c0_i32_0 = arith.constant 0 : i32
    return %c0_i32, %arg1 : i32, i32
  }
  func.func @transform_3(%arg0: i32, %arg1: i32) -> (i32, i32) {
    %c0_i32 = arith.constant 0 : i32
    return %arg0, %arg1 : i32, i32
  }
}

module attributes {stable_mosaic.version = 11 : i64} {
  func.func @_gemm_kernel(%arg0: i32, %arg1: i32, %arg2: memref<8x256xbf16, #tpu.memory_space<vmem>>, %arg3: memref<256x128xbf16, #tpu.memory_space<vmem>>, %arg4: memref<1x128xf32, #tpu.memory_space<vmem>>, %arg5: memref<8x128xf32, #tpu.memory_space<vmem>>) attributes {dimension_semantics = [#tpu.dimension_semantics<parallel>, #tpu.dimension_semantics<parallel>], iteration_bounds = array<i64: 1, 1>, scalar_prefetch = 0 : i64, scratch_operands = 0 : i64, tpu.core_type = #tpu.core_type<tc>, window_params = [{transform_indices = @transform_0, window_bounds = array<i64: 8, 256>}, {transform_indices = @transform_1, window_bounds = array<i64: 256, 128>}, {transform_indices = @transform_2, window_bounds = array<i64: 1, 128>}, {transform_indices = @transform_3, window_bounds = array<i64: 8, 128>}]} {
    %c0 = arith.constant 0 : index
    %c0_0 = arith.constant 0 : index
    %0 = vector.load %arg2[%c0, %c0_0] : memref<8x256xbf16, #tpu.memory_space<vmem>>, vector<8x256xbf16>
    %c0_1 = arith.constant 0 : index
    %c0_2 = arith.constant 0 : index
    %1 = vector.load %arg3[%c0_1, %c0_2] : memref<256x128xbf16, #tpu.memory_space<vmem>>, vector<256x128xbf16>
    %cst = arith.constant dense<0.000000e+00> : vector<8x128xf32>
    %2 = tpu.matmul %0, %1, %cst {dimension_numbers = #tpu.dot_dimension_numbers<[1], [0], [0], [1], [0, 0, 1, 1], [], []>} : vector<8x256xbf16>, vector<256x128xbf16>, vector<8x128xf32> -> vector<8x128xf32>
    %c0_3 = arith.constant 0 : index
    %c0_4 = arith.constant 0 : index
    %3 = vector.load %arg4[%c0_3, %c0_4] : memref<1x128xf32, #tpu.memory_space<vmem>>, vector<1x128xf32>
    %4 = vector.broadcast %3 : vector<1x128xf32> to vector<8x128xf32>
    %5 = arith.addf %2, %4 : vector<8x128xf32>
    %cst_5 = arith.constant 0.000000e+00 : f32
    %6 = vector.broadcast %cst_5 : f32 to vector<8x128xf32>
    %7 = arith.maximumf %5, %6 : vector<8x128xf32>
    %c0_6 = arith.constant 0 : index
    %c0_7 = arith.constant 0 : index
    %8 = vector.load %arg5[%c0_6, %c0_7] : memref<8x128xf32, #tpu.memory_space<vmem>>, vector<8x128xf32>
    tpu.vector_store %arg5[%c0_6, %c0_7], %7 {strides = array<i32>} : memref<8x128xf32, #tpu.memory_space<vmem>>, vector<8x128xf32>,
    return
  }
  func.func @transform_0(%arg0: i32, %arg1: i32) -> (i32, i32) {
    %c0_i32 = arith.constant 0 : i32
    %c0_i32_0 = arith.constant 0 : i32
    return %arg0, %c0_i32 : i32, i32
  }
  func.func @transform_1(%arg0: i32, %arg1: i32) -> (i32, i32) {
    %c0_i32 = arith.constant 0 : i32
    %c0_i32_0 = arith.constant 0 : i32
    return %c0_i32, %arg1 : i32, i32
  }
  func.func @transform_2(%arg0: i32, %arg1: i32) -> (i32, i32) {
    %c0_i32 = arith.constant 0 : i32
    %c0_i32_0 = arith.constant 0 : i32
    return %c0_i32, %arg1 : i32, i32
  }
  func.func @transform_3(%arg0: i32, %arg1: i32) -> (i32, i32) {
    %c0_i32 = arith.constant 0 : i32
    return %arg0, %arg1 : i32, i32
  }
}

module attributes {stable_mosaic.version = 11 : i64} {
  func.func @_gemm_kernel(%arg0: i32, %arg1: i32, %arg2: memref<40x128xbf16, #tpu.memory_space<vmem>>, %arg3: memref<128x128xbf16, #tpu.memory_space<vmem>>, %arg4: memref<1x128xf32, #tpu.memory_space<vmem>>, %arg5: memref<40x128xf32, #tpu.memory_space<vmem>>) attributes {dimension_semantics = [#tpu.dimension_semantics<parallel>, #tpu.dimension_semantics<parallel>], iteration_bounds = array<i64: 1, 1>, scalar_prefetch = 0 : i64, scratch_operands = 0 : i64, tpu.core_type = #tpu.core_type<tc>, window_params = [{transform_indices = @transform_0, window_bounds = array<i64: 40, 128>}, {transform_indices = @transform_1, window_bounds = array<i64: 128, 128>}, {transform_indices = @transform_2, window_bounds = array<i64: 1, 128>}, {transform_indices = @transform_3, window_bounds = array<i64: 40, 128>}]} {
    %c0 = arith.constant 0 : index
    %c0_0 = arith.constant 0 : index
    %0 = vector.load %arg2[%c0, %c0_0] : memref<40x128xbf16, #tpu.memory_space<vmem>>, vector<40x128xbf16>
    %c0_1 = arith.constant 0 : index
    %c0_2 = arith.constant 0 : index
    %1 = vector.load %arg3[%c0_1, %c0_2] : memref<128x128xbf16, #tpu.memory_space<vmem>>, vector<128x128xbf16>
    %cst = arith.constant dense<0.000000e+00> : vector<40x128xf32>
    %2 = tpu.matmul %0, %1, %cst {dimension_numbers = #tpu.dot_dimension_numbers<[1], [0], [0], [1], [0, 0, 1, 1], [], []>} : vector<40x128xbf16>, vector<128x128xbf16>, vector<40x128xf32> -> vector<40x128xf32>
    %c0_3 = arith.constant 0 : index
    %c0_4 = arith.constant 0 : index
    %3 = vector.load %arg4[%c0_3, %c0_4] : memref<1x128xf32, #tpu.memory_space<vmem>>, vector<1x128xf32>
    %4 = vector.broadcast %3 : vector<1x128xf32> to vector<40x128xf32>
    %5 = arith.addf %2, %4 : vector<40x128xf32>
    %6 = arith.negf %5 : vector<40x128xf32>
    %7 = math.exp %6 : vector<40x128xf32>
    %cst_5 = arith.constant 1.000000e+00 : f32
    %8 = vector.broadcast %cst_5 : f32 to vector<40x128xf32>
    %9 = arith.addf %8, %7 : vector<40x128xf32>
    %10 = arith.divf %8, %9 : vector<40x128xf32>
    %11 = tpu.iota {dimensions = array<i32: 0>} : vector<40x128xi32>
    %c40_i32 = arith.constant 40 : i32
    %12 = arith.muli %arg0, %c40_i32 : i32
    %13 = vector.broadcast %12 : i32 to vector<40x128xi32>
    %14 = arith.addi %11, %13 : vector<40x128xi32>
    %c8_i32 = arith.constant 8 : i32
    %15 = vector.broadcast %c8_i32 : i32 to vector<40x128xi32>
    %16 = arith.cmpi sge, %14, %15 : vector<40x128xi32>
    %17 = arith.select %16, %10, %5 : vector<40x128xi1>, vector<40x128xf32>
    %c0_6 = arith.constant 0 : index
    %c0_7 = arith.constant 0 : index
    %18 = vector.load %arg5[%c0_6, %c0_7] : memref<40x128xf32, #tpu.memory_space<vmem>>, vector<40x128xf32>
    tpu.vector_store %arg5[%c0_6, %c0_7], %17 {strides = array<i32>} : memref<40x128xf32, #tpu.memory_space<vmem>>, vector<40x128xf32>,
    return
  }
  func.func @transform_0(%arg0: i32, %arg1: i32) -> (i32, i32) {
    %c0_i32 = arith.constant 0 : i32
    %c0_i32_0 = arith.constant 0 : i32
    return %arg0, %c0_i32 : i32, i32
  }
  func.func @transform_1(%arg0: i32, %arg1: i32) -> (i32, i32) {
    %c0_i32 = arith.constant 0 : i32
    %c0_i32_0 = arith.constant 0 : i32
    return %c0_i32, %arg1 : i32, i32
  }
  func.func @transform_2(%arg0: i32, %arg1: i32) -> (i32, i32) {
    %c0_i32 = arith.constant 0 : i32
    %c0_i32_0 = arith.constant 0 : i32
    return %c0_i32, %arg1 : i32, i32
  }
  func.func @transform_3(%arg0: i32, %arg1: i32) -> (i32, i32) {
    %c0_i32 = arith.constant 0 : i32
    return %arg0, %arg1 : i32, i32
  }
}

</mosaic_0001>

<llo_original>
// kernel: detector_forward.4
$region0: #{detector_forward.4}
  #allocation0 [shape = 'u32[]', space=smem, size = 0x4, offset = 0x4, fixed_abs, tag = 'smem constant byte address 0x4 - core index']
  #allocation1 [shape = 'u32[144,128]{1,0:T(1,128)}', space=vmem, size = 0x12000, scoped, tag = 'internal scratch']
  %s0 = inlined_call_operand.vmem [shape: bf16[128,128], index: 0, kind: input, shape index: {}]
  %s1 = inlined_call_operand.vmem [shape: bf16[128,128], index: 1, kind: input, shape index: {}]
  %s2 = inlined_call_operand.vmem [shape: f32[1,128], index: 2, kind: input, shape index: {}]
  %s3 = inlined_call_operand.vmem [shape: f32[128,128], index: 3, kind: output, shape index: {}]
  %s4 = sld [smem:[#allocation0]]
  $region22: #{detector_forward.4} parent=0
    _
  %s6 = ssub.s32 1, %s4
  %s7 = scalar_select 0, %s6, %s4
  // Predicated region
  $region2: #{detector_forward.4} parent=0 // pred_check
    _
  $region3: #{detector_forward.4} parent=0 // pred_check_branch
    %9 = sbr.rel (0) target = $region5
  $region4: #{detector_forward.4} parent=0 // pred_region
    _
  $region5: #{detector_forward.4} parent=0 // pred_fallthru
    _
  // Predicated region
  $region6: #{detector_forward.4} parent=0 // pred_check
    _
  $region7: #{detector_forward.4} parent=0 // pred_check_branch
    %11 = sbr.rel (0) target = $region9
  $region8: #{detector_forward.4} parent=0 // pred_region
    _
  $region9: #{detector_forward.4} parent=0 // pred_fallthru
    _
  // Predicated region
  $region10: #{detector_forward.4} parent=0 // pred_check
    _
  $region11: #{detector_forward.4} parent=0 // pred_check_branch
    %13 = sbr.rel (0) target = $region13
  $region12: #{detector_forward.4} parent=0 // pred_region
    _
  $region13: #{detector_forward.4} parent=0 // pred_fallthru
    _
  %v15 = vld [vmem:[%s0] sm:$0xf]
  %v16 = vld [vmem:[%s0 + $0x4] sm:$0xf]
  %v17 = vld [vmem:[%s0 + $0x8] sm:$0xf]
  %v18 = vld [vmem:[%s0 + $0xc] sm:$0xf]
  %v19 = vld [vmem:[%s0 + $0x10] sm:$0xf]
  %v20 = vld [vmem:[%s0 + $0x14] sm:$0xf]
  %v21 = vld [vmem:[%s0 + $0x18] sm:$0xf]
  %v22 = vld [vmem:[%s0 + $0x1c] sm:$0xf]
  %v23 = vld [vmem:[%s0 + $0x20] sm:$0xf]
  %v24 = vld [vmem:[%s0 + $0x24] sm:$0xf]
  %v25 = vld [vmem:[%s0 + $0x28] sm:$0xf]
  %v26 = vld [vmem:[%s0 + $0x2c] sm:$0xf]
  %v27 = vld [vmem:[%s0 + $0x30] sm:$0xf]
  %v28 = vld [vmem:[%s0 + $0x34] sm:$0xf]
  %v29 = vld [vmem:[%s0 + $0x38] sm:$0xf]
  %v30 = vld [vmem:[%s0 + $0x3c] sm:$0xf]
  %v31 = vld [vmem:[%s1] sm:$0xf]
  %v32 = vld [vmem:[%s1 + $0x4] sm:$0xf]
  %v33 = vld [vmem:[%s1 + $0x8] sm:$0xf]
  %v34 = vld [vmem:[%s1 + $0xc] sm:$0xf]
  %v35 = vld [vmem:[%s1 + $0x10] sm:$0xf]
  %v36 = vld [vmem:[%s1 + $0x14] sm:$0xf]
  %v37 = vld [vmem:[%s1 + $0x18] sm:$0xf]
  %v38 = vld [vmem:[%s1 + $0x1c] sm:$0xf]
  %v39 = vld [vmem:[%s1 + $0x20] sm:$0xf]
  %v40 = vld [vmem:[%s1 + $0x24] sm:$0xf]
  %v41 = vld [vmem:[%s1 + $0x28] sm:$0xf]
  %v42 = vld [vmem:[%s1 + $0x2c] sm:$0xf]
  %v43 = vld [vmem:[%s1 + $0x30] sm:$0xf]
  %v44 = vld [vmem:[%s1 + $0x34] sm:$0xf]
  %v45 = vld [vmem:[%s1 + $0x38] sm:$0xf]
  %v46 = vld [vmem:[%s1 + $0x3c] sm:$0xf]
  %v47 = vld [vmem:[%s2] sm:$0x1]
  %v49 = vlaneseq
  %v50 = vshrl.u32 %v49, 7
  %v51 = vsub.s32 0, %v50
  %v52 = vrot.slane %v47, %v51
  %v70 = vunpack.c.l.b16 %v15
  %v71 = vunpack.c.l.b16 %v16
  %v72 = vunpack.c.l.b16 %v17
  %v73 = vunpack.c.l.b16 %v18
  %v74 = vunpack.c.l.b16 %v19
  %v75 = vunpack.c.l.b16 %v20
  %v76 = vunpack.c.l.b16 %v21
  %v77 = vunpack.c.l.b16 %v22
  %v78 = vunpack.c.l.b16 %v23
  %v79 = vunpack.c.l.b16 %v24
  %v80 = vunpack.c.l.b16 %v25
  %v81 = vunpack.c.l.b16 %v26
  %v82 = vunpack.c.l.b16 %v27
  %v83 = vunpack.c.l.b16 %v28
  %v84 = vunpack.c.l.b16 %v29
  %v85 = vunpack.c.l.b16 %v30
  %v86 = vpack.c.b16 %v71, %v70
  %v87 = vpack.c.b16 %v73, %v72
  %v88 = vpack.c.b16 %v75, %v74
  %v89 = vpack.c.b16 %v77, %v76
  %v90 = vpack.c.b16 %v79, %v78
  %v91 = vpack.c.b16 %v81, %v80
  %v92 = vpack.c.b16 %v83, %v82
  %v93 = vpack.c.b16 %v85, %v84
  %v118 = vunpack.c.l.b16 %v31
  %v119 = vunpack.c.l.b16 %v32
  %v120 = vunpack.c.l.b16 %v33
  %v121 = vunpack.c.l.b16 %v34
  %v122 = vunpack.c.l.b16 %v35
  %v123 = vunpack.c.l.b16 %v36
  %v124 = vunpack.c.l.b16 %v37
  %v125 = vunpack.c.l.b16 %v38
  %v126 = vunpack.c.l.b16 %v39
  %v127 = vunpack.c.l.b16 %v40
  %v128 = vunpack.c.l.b16 %v41
  %v129 = vunpack.c.l.b16 %v42
  %v130 = vunpack.c.l.b16 %v43
  %v131 = vunpack.c.l.b16 %v44
  %v132 = vunpack.c.l.b16 %v45
  %v133 = vunpack.c.l.b16 %v46
  %v134 = vpack.c.b16 %v119, %v118
  %v135 = vpack.c.b16 %v121, %v120
  %v136 = vpack.c.b16 %v123, %v122
  %v137 = vpack.c.b16 %v125, %v124
  %v138 = vpack.c.b16 %v127, %v126
  %v139 = vpack.c.b16 %v129, %v128
  %v140 = vpack.c.b16 %v131, %v130
  %v141 = vpack.c.b16 %v133, %v132
  %150 = vmatprep.subr.bf16.mxu0 0
  %151 = vmatpush1.bf16.msra.mxu0 %v134
  %152 = vmatprep.subr.bf16.mxu0 0
  %153 = vmatpush1.bf16.msra.mxu0 %v135
  %154 = vmatprep.subr.bf16.mxu0 0
  %155 = vmatpush1.bf16.msra.mxu0 %v136
  %156 = vmatprep.subr.bf16.mxu0 0
  %157 = vmatpush1.bf16.msra.mxu0 %v137
  %158 = vmatprep.subr.bf16.mxu0 0
  %159 = vmatpush1.bf16.msra.mxu0 %v138
  %160 = vmatprep.subr.bf16.mxu0 0
  %161 = vmatpush1.bf16.msra.mxu0 %v139
  %162 = vmatprep.subr.bf16.mxu0 0
  %163 = vmatpush1.bf16.msra.mxu0 %v140
  %164 = vmatprep.subr.bf16.mxu0 0
  %165 = vmatpush1.bf16.msra.mxu0 %v141
  %166 = vmatprep.subr.bf16.mxu0 0
  %167 = vmatpush1.bf16.msra.mxu0 0
  %168 = vmatprep.subr.bf16.mxu0 0
  %169 = vmatpush1.bf16.msra.mxu0 0
  %170 = vmatprep.subr.bf16.mxu0 0
  %171 = vmatpush1.bf16.msra.mxu0 0
  %172 = vmatprep.subr.bf16.mxu0 0
  %173 = vmatpush1.bf16.msra.mxu0 0
  %174 = vmatprep.subr.bf16.mxu0 0
  %175 = vmatpush1.bf16.msra.mxu0 0
  %176 = vmatprep.subr.bf16.mxu0 0
  %177 = vmatpush1.bf16.msra.mxu0 0
  %178 = vmatprep.subr.bf16.mxu0 0
  %179 = vmatpush1.bf16.msra.mxu0 0
  %180 = vmatprep.subr.bf16.mxu0 0
  %181 = vmatpush1.bf16.msra.mxu0 0
  %182 = vmatprep.mubr.bf16.mxu0 0
  %183 = vmatmul.mubr.bf16.gmra.mrb[0].mxu0 %v86
  %v184 = vpop.f32.mrb[0].mxu0
  %v185 = vadd.f32 %v52, %v184
  %v186 = vpop.f32.mrb[0].mxu0
  %v187 = vpop.f32.mrb[0].mxu0
  %v188 = vadd.f32 %v52, %v187
  %v189 = vpop.f32.mrb[0].mxu0
  %190 = vmatprep.mubr.bf16.mxu0 0
  %191 = vmatmul.mubr.bf16.gmra.mrb[0].mxu0 %v87
  %v192 = vpop.f32.mrb[0].mxu0
  %v193 = vadd.f32 %v52, %v192
  %v194 = vpop.f32.mrb[0].mxu0
  %v195 = vpop.f32.mrb[0].mxu0
  %v196 = vadd.f32 %v52, %v195
  %v197 = vpop.f32.mrb[0].mxu0
  %198 = vmatprep.mubr.bf16.mxu0 0
  %199 = vmatmul.mubr.bf16.gmra.mrb[0].mxu0 %v88
  %v200 = vpop.f32.mrb[0].mxu0
  %v201 = vadd.f32 %v52, %v200
  %v202 = vpop.f32.mrb[0].mxu0
  %v203 = vpop.f32.mrb[0].mxu0
  %v204 = vadd.f32 %v52, %v203
  %v205 = vpop.f32.mrb[0].mxu0
  %206 = vmatprep.mubr.bf16.mxu0 0
  %207 = vmatmul.mubr.bf16.gmra.mrb[0].mxu0 %v89
  %v208 = vpop.f32.mrb[0].mxu0
  %v209 = vadd.f32 %v52, %v208
  %v210 = vpop.f32.mrb[0].mxu0
  %v211 = vpop.f32.mrb[0].mxu0
  %v212 = vadd.f32 %v52, %v211
  %v213 = vpop.f32.mrb[0].mxu0
  %214 = vmatprep.mubr.bf16.mxu0 0
  %215 = vmatmul.mubr.bf16.gmra.mrb[0].mxu0 %v90
  %v216 = vpop.f32.mrb[0].mxu0
  %v217 = vadd.f32 %v52, %v216
  %v218 = vpop.f32.mrb[0].mxu0
  %v219 = vpop.f32.mrb[0].mxu0
  %v220 = vadd.f32 %v52, %v219
  %v221 = vpop.f32.mrb[0].mxu0
  %222 = vmatprep.mubr.bf16.mxu0 0
  %223 = vmatmul.mubr.bf16.gmra.mrb[0].mxu0 %v91
  %v224 = vpop.f32.mrb[0].mxu0
  %v225 = vadd.f32 %v52, %v224
  %v226 = vpop.f32.mrb[0].mxu0
  %v227 = vpop.f32.mrb[0].mxu0
  %v228 = vadd.f32 %v52, %v227
  %v229 = vpop.f32.mrb[0].mxu0
  %230 = vmatprep.mubr.bf16.mxu0 0
  %231 = vmatmul.mubr.bf16.gmra.mrb[0].mxu0 %v92
  %v232 = vpop.f32.mrb[0].mxu0
  %v233 = vadd.f32 %v52, %v232
  %v234 = vpop.f32.mrb[0].mxu0
  %v235 = vpop.f32.mrb[0].mxu0
  %v236 = vadd.f32 %v52, %v235
  %v237 = vpop.f32.mrb[0].mxu0
  %238 = vmatprep.mubr.bf16.mxu0 0
  %239 = vmatmul.mubr.bf16.gmra.mrb[0].mxu0 %v93
  %v240 = vpop.f32.mrb[0].mxu0
  %v241 = vadd.f32 %v52, %v240
  %v242 = vpop.f32.mrb[0].mxu0
  %v243 = vpop.f32.mrb[0].mxu0
  %v244 = vadd.f32 %v52, %v243
  %v245 = vpop.f32.mrb[0].mxu0
  %246 = vdwg.mxu0
  %v247 = vmax.f32 %v185, 0.0
  %v248 = vmax.f32 %v188, 0.0
  %v249 = vmax.f32 %v193, 0.0
  %v250 = vmax.f32 %v196, 0.0
  %v251 = vmax.f32 %v201, 0.0
  %v252 = vmax.f32 %v204, 0.0
  %v253 = vmax.f32 %v209, 0.0
  %v254 = vmax.f32 %v212, 0.0
  %v255 = vmax.f32 %v217, 0.0
  %v256 = vmax.f32 %v220, 0.0
  %v257 = vmax.f32 %v225, 0.0
  %v258 = vmax.f32 %v228, 0.0
  %v259 = vmax.f32 %v233, 0.0
  %v260 = vmax.f32 %v236, 0.0
  %v261 = vmax.f32 %v241, 0.0
  %v262 = vmax.f32 %v244, 0.0
  %263 = vst [vmem:[%s3] sm:$0xff] %v247
  %264 = vst [vmem:[%s3 + $0x8] sm:$0xff] %v248
  %265 = vst [vmem:[%s3 + $0x10] sm:$0xff] %v249
  %266 = vst [vmem:[%s3 + $0x18] sm:$0xff] %v250
  %267 = vst [vmem:[%s3 + $0x20] sm:$0xff] %v251
  %268 = vst [vmem:[%s3 + $0x28] sm:$0xff] %v252
  %269 = vst [vmem:[%s3 + $0x30] sm:$0xff] %v253
  %270 = vst [vmem:[%s3 + $0x38] sm:$0xff] %v254
  %271 = vst [vmem:[%s3 + $0x40] sm:$0xff] %v255
  %272 = vst [vmem:[%s3 + $0x48] sm:$0xff] %v256
  %273 = vst [vmem:[%s3 + $0x50] sm:$0xff] %v257
  %274 = vst [vmem:[%s3 + $0x58] sm:$0xff] %v258
  %275 = vst [vmem:[%s3 + $0x60] sm:$0xff] %v259
  %276 = vst [vmem:[%s3 + $0x68] sm:$0xff] %v260
  %277 = vst [vmem:[%s3 + $0x70] sm:$0xff] %v261
  %278 = vst [vmem:[%s3 + $0x78] sm:$0xff] %v262
  // Predicated region
  $region14: #{detector_forward.4} parent=0 // pred_check
    _
  $region15: #{detector_forward.4} parent=0 // pred_check_branch
    %280 = sbr.rel (0) target = $region17
  $region16: #{detector_forward.4} parent=0 // pred_region
    _
  $region17: #{detector_forward.4} parent=0 // pred_fallthru
    _
  // Predicated region
  $region18: #{detector_forward.4} parent=0 // pred_check
    _
  $region19: #{detector_forward.4} parent=0 // pred_check_branch
    %282 = sbr.rel (0) target = $region21
  $region20: #{detector_forward.4} parent=0 // pred_region
    _
  $region21: #{detector_forward.4} parent=0 // pred_fallthru
    _

// kernel: detector_forward.5
$region0: #{detector_forward.5}
  #allocation0 [shape = 'u32[]', space=smem, size = 0x4, offset = 0x4, fixed_abs, tag = 'smem constant byte address 0x4 - core index']
  #allocation1 [shape = 'u32[144,128]{1,0:T(1,128)}', space=vmem, size = 0x12000, scoped, tag = 'internal scratch']
  %s0 = inlined_call_operand.vmem [shape: bf16[32,128], index: 0, kind: input, shape index: {}]
  %s1 = inlined_call_operand.vmem [shape: bf16[128,128], index: 1, kind: input, shape index: {}]
  %s2 = inlined_call_operand.vmem [shape: f32[1,128], index: 2, kind: input, shape index: {}]
  %s3 = inlined_call_operand.vmem [shape: f32[32,128], index: 3, kind: output, shape index: {}]
  %s4 = sld [smem:[#allocation0]]
  $region22: #{detector_forward.5} parent=0
    _
  %s6 = ssub.s32 1, %s4
  %s7 = scalar_select 0, %s6, %s4
  // Predicated region
  $region2: #{detector_forward.5} parent=0 // pred_check
    _
  $region3: #{detector_forward.5} parent=0 // pred_check_branch
    %9 = sbr.rel (0) target = $region5
  $region4: #{detector_forward.5} parent=0 // pred_region
    _
  $region5: #{detector_forward.5} parent=0 // pred_fallthru
    _
  // Predicated region
  $region6: #{detector_forward.5} parent=0 // pred_check
    _
  $region7: #{detector_forward.5} parent=0 // pred_check_branch
    %11 = sbr.rel (0) target = $region9
  $region8: #{detector_forward.5} parent=0 // pred_region
    _
  $region9: #{detector_forward.5} parent=0 // pred_fallthru
    _
  // Predicated region
  $region10: #{detector_forward.5} parent=0 // pred_check
    _
  $region11: #{detector_forward.5} parent=0 // pred_check_branch
    %13 = sbr.rel (0) target = $region13
  $region12: #{detector_forward.5} parent=0 // pred_region
    _
  $region13: #{detector_forward.5} parent=0 // pred_fallthru
    _
  %v15 = vld [vmem:[%s0] sm:$0xf]
  %v16 = vld [vmem:[%s0 + $0x4] sm:$0xf]
  %v17 = vld [vmem:[%s0 + $0x8] sm:$0xf]
  %v18 = vld [vmem:[%s0 + $0xc] sm:$0xf]
  %v19 = vld [vmem:[%s1] sm:$0xf]
  %v20 = vld [vmem:[%s1 + $0x4] sm:$0xf]
  %v21 = vld [vmem:[%s1 + $0x8] sm:$0xf]
  %v22 = vld [vmem:[%s1 + $0xc] sm:$0xf]
  %v23 = vld [vmem:[%s1 + $0x10] sm:$0xf]
  %v24 = vld [vmem:[%s1 + $0x14] sm:$0xf]
  %v25 = vld [vmem:[%s1 + $0x18] sm:$0xf]
  %v26 = vld [vmem:[%s1 + $0x1c] sm:$0xf]
  %v27 = vld [vmem:[%s1 + $0x20] sm:$0xf]
  %v28 = vld [vmem:[%s1 + $0x24] sm:$0xf]
  %v29 = vld [vmem:[%s1 + $0x28] sm:$0xf]
  %v30 = vld [vmem:[%s1 + $0x2c] sm:$0xf]
  %v31 = vld [vmem:[%s1 + $0x30] sm:$0xf]
  %v32 = vld [vmem:[%s1 + $0x34] sm:$0xf]
  %v33 = vld [vmem:[%s1 + $0x38] sm:$0xf]
  %v34 = vld [vmem:[%s1 + $0x3c] sm:$0xf]
  %v35 = vld [vmem:[%s2] sm:$0x1]
  %v37 = vlaneseq
  %v38 = vshrl.u32 %v37, 7
  %v39 = vsub.s32 0, %v38
  %v40 = vrot.slane %v35, %v39
  %v46 = vunpack.c.l.b16 %v15
  %v47 = vunpack.c.l.b16 %v16
  %v48 = vunpack.c.l.b16 %v17
  %v49 = vunpack.c.l.b16 %v18
  %v50 = vpack.c.b16 %v47, %v46
  %v51 = vpack.c.b16 %v49, %v48
  %v70 = vunpack.c.l.b16 %v19
  %v71 = vunpack.c.l.b16 %v20
  %v72 = vunpack.c.l.b16 %v21
  %v73 = vunpack.c.l.b16 %v22
  %v74 = vunpack.c.l.b16 %v23
  %v75 = vunpack.c.l.b16 %v24
  %v76 = vunpack.c.l.b16 %v25
  %v77 = vunpack.c.l.b16 %v26
  %v78 = vunpack.c.l.b16 %v27
  %v79 = vunpack.c.l.b16 %v28
  %v80 = vunpack.c.l.b16 %v29
  %v81 = vunpack.c.l.b16 %v30
  %v82 = vunpack.c.l.b16 %v31
  %v83 = vunpack.c.l.b16 %v32
  %v84 = vunpack.c.l.b16 %v33
  %v85 = vunpack.c.l.b16 %v34
  %v86 = vpack.c.b16 %v71, %v70
  %v87 = vpack.c.b16 %v73, %v72
  %v88 = vpack.c.b16 %v75, %v74
  %v89 = vpack.c.b16 %v77, %v76
  %v90 = vpack.c.b16 %v79, %v78
  %v91 = vpack.c.b16 %v81, %v80
  %v92 = vpack.c.b16 %v83, %v82
  %v93 = vpack.c.b16 %v85, %v84
  %102 = vmatprep.subr.bf16.mxu0 0
  %103 = vmatpush1.bf16.msra.mxu0 %v86
  %104 = vmatprep.subr.bf16.mxu0 0
  %105 = vmatpush1.bf16.msra.mxu0 %v87
  %106 = vmatprep.subr.bf16.mxu0 0
  %107 = vmatpush1.bf16.msra.mxu0 %v88
  %108 = vmatprep.subr.bf16.mxu0 0
  %109 = vmatpush1.bf16.msra.mxu0 %v89
  %110 = vmatprep.subr.bf16.mxu0 0
  %111 = vmatpush1.bf16.msra.mxu0 %v90
  %112 = vmatprep.subr.bf16.mxu0 0
  %113 = vmatpush1.bf16.msra.mxu0 %v91
  %114 = vmatprep.subr.bf16.mxu0 0
  %115 = vmatpush1.bf16.msra.mxu0 %v92
  %116 = vmatprep.subr.bf16.mxu0 0
  %117 = vmatpush1.bf16.msra.mxu0 %v93
  %118 = vmatprep.subr.bf16.mxu0 0
  %119 = vmatpush1.bf16.msra.mxu0 0
  %120 = vmatprep.subr.bf16.mxu0 0
  %121 = vmatpush1.bf16.msra.mxu0 0
  %122 = vmatprep.subr.bf16.mxu0 0
  %123 = vmatpush1.bf16.msra.mxu0 0
  %124 = vmatprep.subr.bf16.mxu0 0
  %125 = vmatpush1.bf16.msra.mxu0 0
  %126 = vmatprep.subr.bf16.mxu0 0
  %127 = vmatpush1.bf16.msra.mxu0 0
  %128 = vmatprep.subr.bf16.mxu0 0
  %129 = vmatpush1.bf16.msra.mxu0 0
  %130 = vmatprep.subr.bf16.mxu0 0
  %131 = vmatpush1.bf16.msra.mxu0 0
  %132 = vmatprep.subr.bf16.mxu0 0
  %133 = vmatpush1.bf16.msra.mxu0 0
  %134 = vmatprep.mubr.bf16.mxu0 0
  %135 = vmatmul.mubr.bf16.gmra.mrb[0].mxu0 %v50
  %v136 = vpop.f32.mrb[0].mxu0
  %v137 = vadd.f32 %v40, %v136
  %v138 = vpop.f32.mrb[0].mxu0
  %v139 = vpop.f32.mrb[0].mxu0
  %v140 = vadd.f32 %v40, %v139
  %v141 = vpop.f32.mrb[0].mxu0
  %142 = vmatprep.mubr.bf16.mxu0 0
  %143 = vmatmul.mubr.bf16.gmra.mrb[0].mxu0 %v51
  %v144 = vpop.f32.mrb[0].mxu0
  %v145 = vadd.f32 %v40, %v144
  %v146 = vpop.f32.mrb[0].mxu0
  %v147 = vpop.f32.mrb[0].mxu0
  %v148 = vadd.f32 %v40, %v147
  %v149 = vpop.f32.mrb[0].mxu0
  %150 = vdwg.mxu0
  %v151 = vmax.f32 %v137, 0.0
  %v152 = vmax.f32 %v140, 0.0
  %v153 = vmax.f32 %v145, 0.0
  %v154 = vmax.f32 %v148, 0.0
  %155 = vst [vmem:[%s3] sm:$0xff] %v151
  %156 = vst [vmem:[%s3 + $0x8] sm:$0xff] %v152
  %157 = vst [vmem:[%s3 + $0x10] sm:$0xff] %v153
  %158 = vst [vmem:[%s3 + $0x18] sm:$0xff] %v154
  // Predicated region
  $region14: #{detector_forward.5} parent=0 // pred_check
    _
  $region15: #{detector_forward.5} parent=0 // pred_check_branch
    %160 = sbr.rel (0) target = $region17
  $region16: #{detector_forward.5} parent=0 // pred_region
    _
  $region17: #{detector_forward.5} parent=0 // pred_fallthru
    _
  // Predicated region
  $region18: #{detector_forward.5} parent=0 // pred_check
    _
  $region19: #{detector_forward.5} parent=0 // pred_check_branch
    %162 = sbr.rel (0) target = $region21
  $region20: #{detector_forward.5} parent=0 // pred_region
    _
  $region21: #{detector_forward.5} parent=0 // pred_fallthru
    _

// kernel: detector_forward.6
$region0: #{detector_forward.6}
  #allocation0 [shape = 'u32[]', space=smem, size = 0x4, offset = 0x4, fixed_abs, tag = 'smem constant byte address 0x4 - core index']
  #allocation1 [shape = 'u32[144,128]{1,0:T(1,128)}', space=vmem, size = 0x12000, scoped, tag = 'internal scratch']
  %s0 = inlined_call_operand.vmem [shape: bf16[8,256], index: 0, kind: input, shape index: {}]
  %s1 = inlined_call_operand.vmem [shape: bf16[256,128], index: 1, kind: input, shape index: {}]
  %s2 = inlined_call_operand.vmem [shape: f32[1,128], index: 2, kind: input, shape index: {}]
  %s3 = inlined_call_operand.vmem [shape: f32[8,128], index: 3, kind: output, shape index: {}]
  %s4 = sld [smem:[#allocation0]]
  $region22: #{detector_forward.6} parent=0
    _
  %s6 = ssub.s32 1, %s4
  %s7 = scalar_select 0, %s6, %s4
  // Predicated region
  $region2: #{detector_forward.6} parent=0 // pred_check
    _
  $region3: #{detector_forward.6} parent=0 // pred_check_branch
    %9 = sbr.rel (0) target = $region5
  $region4: #{detector_forward.6} parent=0 // pred_region
    _
  $region5: #{detector_forward.6} parent=0 // pred_fallthru
    _
  // Predicated region
  $region6: #{detector_forward.6} parent=0 // pred_check
    _
  $region7: #{detector_forward.6} parent=0 // pred_check_branch
    %11 = sbr.rel (0) target = $region9
  $region8: #{detector_forward.6} parent=0 // pred_region
    _
  $region9: #{detector_forward.6} parent=0 // pred_fallthru
    _
  // Predicated region
  $region10: #{detector_forward.6} parent=0 // pred_check
    _
  $region11: #{detector_forward.6} parent=0 // pred_check_branch
    %13 = sbr.rel (0) target = $region13
  $region12: #{detector_forward.6} parent=0 // pred_region
    _
  $region13: #{detector_forward.6} parent=0 // pred_fallthru
    _
  %v15 = vld [vmem:[%s0] sm:$0xff]
  %v16 = vld [vmem:[%s1] sm:$0xf]
  %v17 = vld [vmem:[%s1 + $0x4] sm:$0xf]
  %v18 = vld [vmem:[%s1 + $0x8] sm:$0xf]
  %v19 = vld [vmem:[%s1 + $0xc] sm:$0xf]
  %v20 = vld [vmem:[%s1 + $0x10] sm:$0xf]
  %v21 = vld [vmem:[%s1 + $0x14] sm:$0xf]
  %v22 = vld [vmem:[%s1 + $0x18] sm:$0xf]
  %v23 = vld [vmem:[%s1 + $0x1c] sm:$0xf]
  %v24 = vld [vmem:[%s1 + $0x20] sm:$0xf]
  %v25 = vld [vmem:[%s1 + $0x24] sm:$0xf]
  %v26 = vld [vmem:[%s1 + $0x28] sm:$0xf]
  %v27 = vld [vmem:[%s1 + $0x2c] sm:$0xf]
  %v28 = vld [vmem:[%s1 + $0x30] sm:$0xf]
  %v29 = vld [vmem:[%s1 + $0x34] sm:$0xf]
  %v30 = vld [vmem:[%s1 + $0x38] sm:$0xf]
  %v31 = vld [vmem:[%s1 + $0x3c] sm:$0xf]
  %v32 = vld [vmem:[%s1 + $0x40] sm:$0xf]
  %v33 = vld [vmem:[%s1 + $0x44] sm:$0xf]
  %v34 = vld [vmem:[%s1 + $0x48] sm:$0xf]
  %v35 = vld [vmem:[%s1 + $0x4c] sm:$0xf]
  %v36 = vld [vmem:[%s1 + $0x50] sm:$0xf]
  %v37 = vld [vmem:[%s1 + $0x54] sm:$0xf]
  %v38 = vld [vmem:[%s1 + $0x58] sm:$0xf]
  %v39 = vld [vmem:[%s1 + $0x5c] sm:$0xf]
  %v40 = vld [vmem:[%s1 + $0x60] sm:$0xf]
  %v41 = vld [vmem:[%s1 + $0x64] sm:$0xf]
  %v42 = vld [vmem:[%s1 + $0x68] sm:$0xf]
  %v43 = vld [vmem:[%s1 + $0x6c] sm:$0xf]
  %v44 = vld [vmem:[%s1 + $0x70] sm:$0xf]
  %v45 = vld [vmem:[%s1 + $0x74] sm:$0xf]
  %v46 = vld [vmem:[%s1 + $0x78] sm:$0xf]
  %v47 = vld [vmem:[%s1 + $0x7c] sm:$0xf]
  %v48 = vld [vmem:[%s2] sm:$0x1]
  %v50 = vlaneseq
  %v51 = vshrl.u32 %v50, 7
  %v52 = vsub.s32 0, %v51
  %v53 = vrot.slane %v48, %v52
  %v56 = vunpack.c.l.b16 %v15
  %v57 = vunpack.c.h.b16 %v15
  %v58 = vpack.c.b16 %v56, %v56
  %v59 = vpack.c.b16 %v57, %v57
  %v94 = vunpack.c.l.b16 %v16
  %v95 = vunpack.c.l.b16 %v17
  %v96 = vunpack.c.l.b16 %v18
  %v97 = vunpack.c.l.b16 %v19
  %v98 = vunpack.c.l.b16 %v20
  %v99 = vunpack.c.l.b16 %v21
  %v100 = vunpack.c.l.b16 %v22
  %v101 = vunpack.c.l.b16 %v23
  %v102 = vunpack.c.l.b16 %v24
  %v103 = vunpack.c.l.b16 %v25
  %v104 = vunpack.c.l.b16 %v26
  %v105 = vunpack.c.l.b16 %v27
  %v106 = vunpack.c.l.b16 %v28
  %v107 = vunpack.c.l.b16 %v29
  %v108 = vunpack.c.l.b16 %v30
  %v109 = vunpack.c.l.b16 %v31
  %v110 = vunpack.c.l.b16 %v32
  %v111 = vunpack.c.l.b16 %v33
  %v112 = vunpack.c.l.b16 %v34
  %v113 = vunpack.c.l.b16 %v35
  %v114 = vunpack.c.l.b16 %v36
  %v115 = vunpack.c.l.b16 %v37
  %v116 = vunpack.c.l.b16 %v38
  %v117 = vunpack.c.l.b16 %v39
  %v118 = vunpack.c.l.b16 %v40
  %v119 = vunpack.c.l.b16 %v41
  %v120 = vunpack.c.l.b16 %v42
  %v121 = vunpack.c.l.b16 %v43
  %v122 = vunpack.c.l.b16 %v44
  %v123 = vunpack.c.l.b16 %v45
  %v124 = vunpack.c.l.b16 %v46
  %v125 = vunpack.c.l.b16 %v47
  %v126 = vpack.c.b16 %v95, %v94
  %v127 = vpack.c.b16 %v97, %v96
  %v128 = vpack.c.b16 %v99, %v98
  %v129 = vpack.c.b16 %v101, %v100
  %v130 = vpack.c.b16 %v103, %v102
  %v131 = vpack.c.b16 %v105, %v104
  %v132 = vpack.c.b16 %v107, %v106
  %v133 = vpack.c.b16 %v109, %v108
  %v134 = vpack.c.b16 %v111, %v110
  %v135 = vpack.c.b16 %v113, %v112
  %v136 = vpack.c.b16 %v115, %v114
  %v137 = vpack.c.b16 %v117, %v116
  %v138 = vpack.c.b16 %v119, %v118
  %v139 = vpack.c.b16 %v121, %v120
  %v140 = vpack.c.b16 %v123, %v122
  %v141 = vpack.c.b16 %v125, %v124
  %158 = vmatprep.subr.bf16.mxu0 0
  %159 = vmatpush1.bf16.msra.mxu0 %v126
  %160 = vmatprep.subr.bf16.mxu0 0
  %161 = vmatpush1.bf16.msra.mxu0 %v127
  %162 = vmatprep.subr.bf16.mxu0 0
  %163 = vmatpush1.bf16.msra.mxu0 %v128
  %164 = vmatprep.subr.bf16.mxu0 0
  %165 = vmatpush1.bf16.msra.mxu0 %v129
  %166 = vmatprep.subr.bf16.mxu0 0
  %167 = vmatpush1.bf16.msra.mxu0 %v130
  %168 = vmatprep.subr.bf16.mxu0 0
  %169 = vmatpush1.bf16.msra.mxu0 %v131
  %170 = vmatprep.subr.bf16.mxu0 0
  %171 = vmatpush1.bf16.msra.mxu0 %v132
  %172 = vmatprep.subr.bf16.mxu0 0
  %173 = vmatpush1.bf16.msra.mxu0 %v133
  %174 = vmatprep.subr.bf16.mxu0 0
  %175 = vmatpush1.bf16.msra.mxu0 %v134
  %176 = vmatprep.subr.bf16.mxu0 0
  %177 = vmatpush1.bf16.msra.mxu0 %v135
  %178 = vmatprep.subr.bf16.mxu0 0
  %179 = vmatpush1.bf16.msra.mxu0 %v136
  %180 = vmatprep.subr.bf16.mxu0 0
  %181 = vmatpush1.bf16.msra.mxu0 %v137
  %182 = vmatprep.subr.bf16.mxu0 0
  %183 = vmatpush1.bf16.msra.mxu0 %v138
  %184 = vmatprep.subr.bf16.mxu0 0
  %185 = vmatpush1.bf16.msra.mxu0 %v139
  %186 = vmatprep.subr.bf16.mxu0 0
  %187 = vmatpush1.bf16.msra.mxu0 %v140
  %188 = vmatprep.subr.bf16.mxu0 0
  %189 = vmatpush1.bf16.msra.mxu0 %v141
  %190 = vmatprep.mubr.bf16.mxu0 %v59
  %191 = vmatmul.mubr.bf16.gmra.mrb[0].mxu0 %v58
  %v192 = vpop.f32.mrb[0].mxu0
  %v193 = vadd.f32 %v53, %v192
  %v194 = vpop.f32.mrb[0].mxu0
  %v195 = vpop.f32.mrb[0].mxu0
  %v196 = vpop.f32.mrb[0].mxu0
  %197 = vdwg.mxu0
  %v198 = vmax.f32 %v193, 0.0
  %199 = vst [vmem:[%s3] sm:$0xff] %v198
  // Predicated region
  $region14: #{detector_forward.6} parent=0 // pred_check
    _
  $region15: #{detector_forward.6} parent=0 // pred_check_branch
    %201 = sbr.rel (0) target = $region17
  $region16: #{detector_forward.6} parent=0 // pred_region
    _
  $region17: #{detector_forward.6} parent=0 // pred_fallthru
    _
  // Predicated region
  $region18: #{detector_forward.6} parent=0 // pred_check
    _
  $region19: #{detector_forward.6} parent=0 // pred_check_branch
    %203 = sbr.rel (0) target = $region21
  $region20: #{detector_forward.6} parent=0 // pred_region
    _
  $region21: #{detector_forward.6} parent=0 // pred_fallthru
    _

// kernel: detector_forward.7
$region0: #{detector_forward.7}
  #allocation0 [shape = 'u32[]', space=smem, size = 0x4, offset = 0x4, fixed_abs, tag = 'smem constant byte address 0x4 - core index']
  #allocation1 [shape = 'u32[144,128]{1,0:T(1,128)}', space=vmem, size = 0x12000, scoped, tag = 'internal scratch']
  %s0 = inlined_call_operand.vmem [shape: bf16[40,128], index: 0, kind: input, shape index: {}]
  %s1 = inlined_call_operand.vmem [shape: bf16[128,128], index: 1, kind: input, shape index: {}]
  %s2 = inlined_call_operand.vmem [shape: f32[1,128], index: 2, kind: input, shape index: {}]
  %s3 = inlined_call_operand.vmem [shape: f32[40,128], index: 3, kind: output, shape index: {}]
  %s4 = sld [smem:[#allocation0]]
  $region22: #{detector_forward.7} parent=0
    _
  %s6 = ssub.s32 1, %s4
  %s7 = scalar_select 0, %s6, %s4
  // Predicated region
  $region2: #{detector_forward.7} parent=0 // pred_check
    _
  $region3: #{detector_forward.7} parent=0 // pred_check_branch
    %9 = sbr.rel (0) target = $region5
  $region4: #{detector_forward.7} parent=0 // pred_region
    _
  $region5: #{detector_forward.7} parent=0 // pred_fallthru
    _
  // Predicated region
  $region6: #{detector_forward.7} parent=0 // pred_check
    _
  $region7: #{detector_forward.7} parent=0 // pred_check_branch
    %11 = sbr.rel (0) target = $region9
  $region8: #{detector_forward.7} parent=0 // pred_region
    _
  $region9: #{detector_forward.7} parent=0 // pred_fallthru
    _
  // Predicated region
  $region10: #{detector_forward.7} parent=0 // pred_check
    _
  $region11: #{detector_forward.7} parent=0 // pred_check_branch
    %13 = sbr.rel (0) target = $region13
  $region12: #{detector_forward.7} parent=0 // pred_region
    _
  $region13: #{detector_forward.7} parent=0 // pred_fallthru
    _
  %v15 = vld [vmem:[%s0] sm:$0xf]
  %v16 = vld [vmem:[%s0 + $0x4] sm:$0xf]
  %v17 = vld [vmem:[%s0 + $0x8] sm:$0xf]
  %v18 = vld [vmem:[%s0 + $0xc] sm:$0xf]
  %v19 = vld [vmem:[%s0 + $0x10] sm:$0xf]
  %v20 = vld [vmem:[%s1] sm:$0xf]
  %v21 = vld [vmem:[%s1 + $0x4] sm:$0xf]
  %v22 = vld [vmem:[%s1 + $0x8] sm:$0xf]
  %v23 = vld [vmem:[%s1 + $0xc] sm:$0xf]
  %v24 = vld [vmem:[%s1 + $0x10] sm:$0xf]
  %v25 = vld [vmem:[%s1 + $0x14] sm:$0xf]
  %v26 = vld [vmem:[%s1 + $0x18] sm:$0xf]
  %v27 = vld [vmem:[%s1 + $0x1c] sm:$0xf]
  %v28 = vld [vmem:[%s1 + $0x20] sm:$0xf]
  %v29 = vld [vmem:[%s1 + $0x24] sm:$0xf]
  %v30 = vld [vmem:[%s1 + $0x28] sm:$0xf]
  %v31 = vld [vmem:[%s1 + $0x2c] sm:$0xf]
  %v32 = vld [vmem:[%s1 + $0x30] sm:$0xf]
  %v33 = vld [vmem:[%s1 + $0x34] sm:$0xf]
  %v34 = vld [vmem:[%s1 + $0x38] sm:$0xf]
  %v35 = vld [vmem:[%s1 + $0x3c] sm:$0xf]
  %v36 = vld [vmem:[%s2] sm:$0x1]
  %v38 = vlaneseq
  %v39 = vshrl.u32 %v38, 7
  %v40 = vsub.s32 0, %v39
  %v41 = vrot.slane %v36, %v40
  %v48 = vunpack.c.l.b16 %v15
  %v49 = vunpack.c.l.b16 %v16
  %v50 = vunpack.c.l.b16 %v17
  %v51 = vunpack.c.l.b16 %v18
  %v52 = vunpack.c.l.b16 %v19
  %v53 = vpack.c.b16 %v49, %v48
  %v54 = vpack.c.b16 %v51, %v50
  %v55 = vpack.c.b16 %v52, %v52
  %v75 = vunpack.c.l.b16 %v20
  %v76 = vunpack.c.l.b16 %v21
  %v77 = vunpack.c.l.b16 %v22
  %v78 = vunpack.c.l.b16 %v23
  %v79 = vunpack.c.l.b16 %v24
  %v80 = vunpack.c.l.b16 %v25
  %v81 = vunpack.c.l.b16 %v26
  %v82 = vunpack.c.l.b16 %v27
  %v83 = vunpack.c.l.b16 %v28
  %v84 = vunpack.c.l.b16 %v29
  %v85 = vunpack.c.l.b16 %v30
  %v86 = vunpack.c.l.b16 %v31
  %v87 = vunpack.c.l.b16 %v32
  %v88 = vunpack.c.l.b16 %v33
  %v89 = vunpack.c.l.b16 %v34
  %v90 = vunpack.c.l.b16 %v35
  %v91 = vpack.c.b16 %v76, %v75
  %v92 = vpack.c.b16 %v78, %v77
  %v93 = vpack.c.b16 %v80, %v79
  %v94 = vpack.c.b16 %v82, %v81
  %v95 = vpack.c.b16 %v84, %v83
  %v96 = vpack.c.b16 %v86, %v85
  %v97 = vpack.c.b16 %v88, %v87
  %v98 = vpack.c.b16 %v90, %v89
  %107 = vmatprep.subr.bf16.mxu0 0
  %108 = vmatpush1.bf16.msra.mxu0 %v91
  %109 = vmatprep.subr.bf16.mxu0 0
  %110 = vmatpush1.bf16.msra.mxu0 %v92
  %111 = vmatprep.subr.bf16.mxu0 0
  %112 = vmatpush1.bf16.msra.mxu0 %v93
  %113 = vmatprep.subr.bf16.mxu0 0
  %114 = vmatpush1.bf16.msra.mxu0 %v94
  %115 = vmatprep.subr.bf16.mxu0 0
  %116 = vmatpush1.bf16.msra.mxu0 %v95
  %117 = vmatprep.subr.bf16.mxu0 0
  %118 = vmatpush1.bf16.msra.mxu0 %v96
  %119 = vmatprep.subr.bf16.mxu0 0
  %120 = vmatpush1.bf16.msra.mxu0 %v97
  %121 = vmatprep.subr.bf16.mxu0 0
  %122 = vmatpush1.bf16.msra.mxu0 %v98
  %123 = vmatprep.subr.bf16.mxu0 0
  %124 = vmatpush1.bf16.msra.mxu0 0
  %125 = vmatprep.subr.bf16.mxu0 0
  %126 = vmatpush1.bf16.msra.mxu0 0
  %127 = vmatprep.subr.bf16.mxu0 0
  %128 = vmatpush1.bf16.msra.mxu0 0
  %129 = vmatprep.subr.bf16.mxu0 0
  %130 = vmatpush1.bf16.msra.mxu0 0
  %131 = vmatprep.subr.bf16.mxu0 0
  %132 = vmatpush1.bf16.msra.mxu0 0
  %133 = vmatprep.subr.bf16.mxu0 0
  %134 = vmatpush1.bf16.msra.mxu0 0
  %135 = vmatprep.subr.bf16.mxu0 0
  %136 = vmatpush1.bf16.msra.mxu0 0
  %137 = vmatprep.subr.bf16.mxu0 0
  %138 = vmatpush1.bf16.msra.mxu0 0
  %139 = vmatprep.mubr.bf16.mxu0 0
  %140 = vmatmul.mubr.bf16.gmra.mrb[0].mxu0 %v53
  %v141 = vpop.f32.mrb[0].mxu0
  %v142 = vadd.f32 %v41, %v141
  %v143 = vpop.f32.mrb[0].mxu0
  %v144 = vpop.f32.mrb[0].mxu0
  %v145 = vadd.f32 %v41, %v144
  %v146 = vpop.f32.mrb[0].mxu0
  %147 = vmatprep.mubr.bf16.mxu0 0
  %148 = vmatmul.mubr.bf16.gmra.mrb[0].mxu0 %v54
  %v149 = vpop.f32.mrb[0].mxu0
  %v150 = vadd.f32 %v41, %v149
  %v151 = vpop.f32.mrb[0].mxu0
  %v152 = vpop.f32.mrb[0].mxu0
  %v153 = vadd.f32 %v41, %v152
  %v154 = vpop.f32.mrb[0].mxu0
  %155 = vmatprep.mubr.bf16.mxu0 0
  %156 = vmatmul.mubr.bf16.gmra.mrb[0].mxu0 %v55
  %v157 = vpop.f32.mrb[0].mxu0
  %v158 = vadd.f32 %v41, %v157
  %v159 = vpop.f32.mrb[0].mxu0
  %v160 = vpop.f32.mrb[0].mxu0
  %v161 = vpop.f32.mrb[0].mxu0
  %162 = vdwg.mxu0
  %v163 = vxor.u32 %v142, 2147483648
  %v164 = vxor.u32 %v145, 2147483648
  %v165 = vxor.u32 %v150, 2147483648
  %v166 = vxor.u32 %v153, 2147483648
  %v167 = vxor.u32 %v158, 2147483648
  %v168 = vmul.f32 %v163, 1.442695
  %v169 = vpow.pop %v168
  %v170 = vmul.f32 %v164, 1.442695
  %v171 = vpow.pop %v170
  %v172 = vmul.f32 %v165, 1.442695
  %v173 = vpow.pop %v172
  %v174 = vmul.f32 %v166, 1.442695
  %v175 = vpow.pop %v174
  %v176 = vmul.f32 %v167, 1.442695
  %v177 = vpow.pop %v176
  %v178 = vadd.f32 %v169, 1.0
  %v179 = vadd.f32 %v171, 1.0
  %v180 = vadd.f32 %v173, 1.0
  %v181 = vadd.f32 %v175, 1.0
  %v182 = vadd.f32 %v177, 1.0
  %v183 = vrcp.pop %v178
  %v184 = vmul.f32 1.0, %v183
  %v185 = vrcp.pop %v179
  %v186 = vmul.f32 1.0, %v185
  %v187 = vrcp.pop %v180
  %v188 = vmul.f32 1.0, %v187
  %v189 = vrcp.pop %v181
  %v190 = vmul.f32 1.0, %v189
  %v191 = vrcp.pop %v182
  %v192 = vmul.f32 1.0, %v191
  %v193 = vlaneseq
  %v194 = vshrl.u32 %v193, 7
  %v195 = vadd.s32 %v194, 8
  %v196 = vadd.s32 %v194, 16
  %v197 = vadd.s32 %v194, 24
  %v198 = vadd.s32 %v194, 32
  %s199 = smul.u32 0, 40
  %v200 = vstv %s199
  %v201 = vadd.s32 %v194, %v200
  %v202 = vadd.s32 %v195, %v200
  %v203 = vadd.s32 %v196, %v200
  %v204 = vadd.s32 %v197, %v200
  %v205 = vadd.s32 %v198, %v200
  %vm206 = vcmp.ge.s32.totalorder %v201, 8
  %vm207 = vcmp.ge.s32.totalorder %v202, 8
  %vm208 = vcmp.ge.s32.totalorder %v203, 8
  %vm209 = vcmp.ge.s32.totalorder %v204, 8
  %vm210 = vcmp.ge.s32.totalorder %v205, 8
  %v211 = vsel %vm206, %v184, %v142
  %v212 = vsel %vm207, %v186, %v145
  %v213 = vsel %vm208, %v188, %v150
  %v214 = vsel %vm209, %v190, %v153
  %v215 = vsel %vm210, %v192, %v158
  %216 = vst [vmem:[%s3] sm:$0xff] %v211
  %217 = vst [vmem:[%s3 + $0x8] sm:$0xff] %v212
  %218 = vst [vmem:[%s3 + $0x10] sm:$0xff] %v213
  %219 = vst [vmem:[%s3 + $0x18] sm:$0xff] %v214
  %220 = vst [vmem:[%s3 + $0x20] sm:$0xff] %v215
  // Predicated region
  $region14: #{detector_forward.7} parent=0 // pred_check
    _
  $region15: #{detector_forward.7} parent=0 // pred_check_branch
    %222 = sbr.rel (0) target = $region17
  $region16: #{detector_forward.7} parent=0 // pred_region
    _
  $region17: #{detector_forward.7} parent=0 // pred_fallthru
    _
  // Predicated region
  $region18: #{detector_forward.7} parent=0 // pred_check
    _
  $region19: #{detector_forward.7} parent=0 // pred_check_branch
    %224 = sbr.rel (0) target = $region21
  $region20: #{detector_forward.7} parent=0 // pred_region
    _
  $region21: #{detector_forward.7} parent=0 // pred_fallthru
    _

</llo_original>
